<compile_context>
chip_gen: v6e
topology: v6e:2x2x1
jax: 0.10.0
libtpu: 0.0.40
codegen_flags: <defaults>
</compile_context>

<pallas_src>
import jax
import jax.numpy as jnp
from jax import lax
from jax.experimental import pallas as pl
from jax.experimental.pallas import tpu as pltpu

# ---- module constants (mirrors the PyTorch script) -------------------------
hidden_dim = 20
n_layers = 1
text = '\nThe quick brown fox jumps over the lazy dog.\nThe cat runs fast and jumps high.\n'.lower()
chars = sorted(list(set(text)))
vocab_size = len(chars)

LANES = 128                 # vreg lane width: every padded operand uses this many lanes
WHH_OFF = LANES             # packed-buffer row offsets (multiples of 8 -> tile-aligned slices)
WFC_OFF = 2 * LANES
BFC_OFF = 3 * LANES
PACK_ROWS = 3 * LANES + 8   # 392 rows


# ---- Pallas kernel ----------------------------------------------------------
def char_rnn_kernel(idx_ref, h0_ref, w_ref, out_ref):
    # idx_ref : (B*S, 1)   int32  token ids, batch-major rows (row = b*S + t)
    # h0_ref  : (B, 128)   f32    initial hidden state, lane-padded (cols >= H are 0)
    # w_ref   : (392, 128) f32    packed weights:
    #             rows [  0,128) xin   = embed @ W_ih^T + b_ih + b_hh   (V x H at top-left)
    #             rows [128,256) whh_t = W_hh^T                         (H x H at top-left)
    #             rows [256,384) wfc_t = W_fc^T                         (H x V at top-left)
    #             row   384      bfc   = b_fc                           (first V lanes)
    # out_ref : (B*S + B, 128) f32:
    #             rows [0, B*S)      logits, batch-major (row = b*S + t), first V lanes valid
    #             rows [B*S, B*S+B)  final hidden state, first H lanes valid
    BS = idx_ref.shape[0]
    B = h0_ref.shape[0]
    S = BS // B

    xin = w_ref[0:LANES, :]                     # static, tile-aligned slices (cheap loads)
    whh_t = w_ref[WHH_OFF:WHH_OFF + LANES, :]
    wfc_t = w_ref[WFC_OFF:WFC_OFF + LANES, :]
    bfc = w_ref[BFC_OFF:BFC_OFF + 1, :]

    # Fused embedding lookup + input projection for ALL tokens: one one-hot MXU matmul,
    # hoisted off the serial recurrence chain.  Padded rows/lanes of xin are zero.
    ids = idx_ref[...]                                                        # (BS, 1)
    one_hot = (lax.broadcasted_iota(jnp.int32, (BS, LANES), 1) == ids).astype(jnp.float32)
    x_pre = jnp.dot(one_hot, xin, preferred_element_type=jnp.float32)         # (BS, 128)

    # Per-step (B, 128) input blocks: rows {b*S + t}.  Independent of h -> off the critical path.
    x_steps = [
        jnp.concatenate([x_pre[b * S + t:b * S + t + 1, :] for b in range(B)], axis=0)
        for t in range(S)
    ]

    # Serial recurrence, fully unrolled; only the MXU dot uses bf16 operands (f32 accumulate),
    # adds/tanh stay f32 (v5e has no bf16 VPU/EUP).  Padded lanes stay exactly 0 (tanh(0)=0).
    whh_bf16 = whh_t.astype(jnp.bfloat16)       # hoisted: cast the 128x128 RHS once
    h = h0_ref[...]                             # (B, 128)
    h_list = []
    for t in range(S):
        hh = jnp.dot(h.astype(jnp.bfloat16), whh_bf16, preferred_element_type=jnp.float32)
        h = jnp.tanh(x_steps[t] + hh)
        h_list.append(h)

    # Batch-major FC operand assembled in registers (row b*S + t <- h_t[b]); one lane-dense
    # matmul + bias, final hidden folded into the same output slab -> a single output store.
    h_bm = jnp.concatenate(
        [h_list[t][b:b + 1, :] for b in range(B) for t in range(S)], axis=0)   # (BS, 128)
    logits = jnp.dot(h_bm, wfc_t, preferred_element_type=jnp.float32) + bfc    # (BS, 128)
    out_ref[...] = jnp.concatenate([logits, h], axis=0)                        # (BS + B, 128)


# ---- wrappers ----------------------------------------------------------------
def pack_char_rnn_params(params):
    """Weight-static precompute + packing into one lane-dense (392, 128) f32 buffer.
    Runs once per weight update, NOT in the per-forward path."""
    embed, w_ih, w_hh = params["embed"], params["w_ih"], params["w_hh"]
    b_ih, b_hh = params["b_ih"], params["b_hh"]
    w_fc, b_fc = params["w_fc"], params["b_fc"]
    V, H = embed.shape

    xin = jnp.dot(embed, w_ih.T) + (b_ih + b_hh)[None, :]                 # (V, H)
    buf = jnp.zeros((PACK_ROWS, LANES), jnp.float32)
    buf = buf.at[0:V, 0:H].set(xin)
    buf = buf.at[WHH_OFF:WHH_OFF + H, 0:H].set(w_hh.T)
    buf = buf.at[WFC_OFF:WFC_OFF + H, 0:V].set(w_fc.T)
    buf = buf.at[BFC_OFF, 0:V].set(b_fc)
    return buf


def char_rnn_forward(x_idx, hidden, packed_w):
    """x_idx: (B, S) int token ids; hidden: (n_layers=1, B, H) f32; packed_w from
    pack_char_rnn_params.  Returns (out, hidden_out) matching the PyTorch module:
      out: (B, S, vocab_size), hidden_out: (n_layers, B, H)."""
    B, S = x_idx.shape
    H = hidden.shape[-1]
    V = vocab_size

    idx = x_idx.astype(jnp.int32).reshape(B * S, 1)                       # batch-major, no transpose
    h0 = jnp.zeros((B, LANES), jnp.float32).at[:, :H].set(hidden[0])      # lane-pad initial state

    vmem = pl.BlockSpec(memory_space=pltpu.MemorySpace.VMEM)
    out_pad = pl.pallas_call(
        char_rnn_kernel,
        out_shape=jax.ShapeDtypeStruct((B * S + B, LANES), jnp.float32),
        in_specs=[vmem, vmem, vmem],
        out_specs=vmem,
    )(idx, h0, packed_w)

    out = out_pad[:B * S, :V].reshape(B, S, V)        # strip lane padding (tiny fused slices)
    h_n = out_pad[B * S:, :H][None, :, :]
    return out, h_n


def _reference_forward(x_idx, hidden, params):
    """Pure-JAX reference of the PyTorch forward, for correctness checking."""
    x_emb = jnp.take(params["embed"], x_idx, axis=0)          # (B, S, H)
    h = hidden[0]
    outs = []
    for t in range(x_idx.shape[1]):
        pre = (x_emb[:, t, :] @ params["w_ih"].T + params["b_ih"]
               + h @ params["w_hh"].T + params["b_hh"])
        h = jnp.tanh(pre)
        outs.append(h @ params["w_fc"].T + params["b_fc"])
    out = jnp.stack(outs, axis=1)                             # (B, S, V)
    return out, h[None, :, :]


if __name__ == "__main__":
    key = jax.random.PRNGKey(0)
    k_emb, k_ih, k_hh, k_bih, k_bhh, k_fc, k_bfc, k_x, k_h = jax.random.split(key, 9)

    B, S, H, V = 2, 8, hidden_dim, vocab_size

    params = {
        "embed": jax.random.normal(k_emb, (V, H), jnp.float32) * 0.1,
        "w_ih": jax.random.normal(k_ih, (H, H), jnp.float32) * 0.1,
        "w_hh": jax.random.normal(k_hh, (H, H), jnp.float32) * 0.1,
        "b_ih": jax.random.normal(k_bih, (H,), jnp.float32) * 0.1,
        "b_hh": jax.random.normal(k_bhh, (H,), jnp.float32) * 0.1,
        "w_fc": jax.random.normal(k_fc, (V, H), jnp.float32) * 0.1,
        "b_fc": jax.random.normal(k_bfc, (V,), jnp.float32) * 0.1,
    }

    x_idx = jax.random.randint(k_x, (B, S), 0, V, dtype=jnp.int32)
    # init_hidden() would be zeros; use a small non-zero state so the h0 path is exercised too.
    hidden0 = jax.random.normal(k_h, (n_layers, B, H), jnp.float32) * 0.1

    packed = pack_char_rnn_params(params)            # weight-static, hoisted out of per-call path
    fwd = jax.jit(char_rnn_forward)

    out, h_n = fwd(x_idx, hidden0, packed)
    out = jax.block_until_ready(out)
    h_n = jax.block_until_ready(h_n)

    ref_out, ref_h = _reference_forward(x_idx, hidden0, params)
    assert out.shape == (B, S, V) and h_n.shape == (n_layers, B, H)
    # Tolerance covers the bf16 recurrence-dot operands (review-sanctioned); observed error ~1e-3.
    assert jnp.allclose(out, ref_out, atol=2e-2, rtol=2e-2), float(jnp.max(jnp.abs(out - ref_out)))
    assert jnp.allclose(h_n, ref_h, atol=2e-2, rtol=2e-2), float(jnp.max(jnp.abs(h_n - ref_h)))

    print("KERNEL_OK")
</pallas_src>

<mosaic_0001>
module attributes {stable_mosaic.version = 11 : i64} {
  func.func @char_rnn_kernel(%arg0: memref<16x1xi32, #tpu.memory_space<vmem>>, %arg1: memref<2x128xf32, #tpu.memory_space<vmem>>, %arg2: memref<392x128xf32, #tpu.memory_space<vmem>>, %arg3: memref<18x128xf32, #tpu.memory_space<vmem>>) attributes {dimension_semantics = [], scalar_prefetch = 0 : i64, scratch_operands = 0 : i64, tpu.core_type = #tpu.core_type<tc>} {
    %c0 = arith.constant 0 : index
    %c0_0 = arith.constant 0 : index
    %0 = vector.load %arg2[%c0, %c0_0] : memref<392x128xf32, #tpu.memory_space<vmem>>, vector<128x128xf32>
    %c128 = arith.constant 128 : index
    %c0_1 = arith.constant 0 : index
    %1 = vector.load %arg2[%c128, %c0_1] : memref<392x128xf32, #tpu.memory_space<vmem>>, vector<128x128xf32>
    %c256 = arith.constant 256 : index
    %c0_2 = arith.constant 0 : index
    %2 = vector.load %arg2[%c256, %c0_2] : memref<392x128xf32, #tpu.memory_space<vmem>>, vector<128x128xf32>
    %c384 = arith.constant 384 : index
    %c0_3 = arith.constant 0 : index
    %3 = vector.load %arg2[%c384, %c0_3] : memref<392x128xf32, #tpu.memory_space<vmem>>, vector<1x128xf32>
    %c0_4 = arith.constant 0 : index
    %c0_5 = arith.constant 0 : index
    %4 = vector.load %arg0[%c0_4, %c0_5] : memref<16x1xi32, #tpu.memory_space<vmem>>, vector<16x1xi32>
    %5 = tpu.iota {dimensions = array<i32: 1>} : vector<16x128xi32>
    %6 = vector.broadcast %4 : vector<16x1xi32> to vector<16x128xi32>
    %7 = arith.cmpi eq, %5, %6 : vector<16x128xi32>
    %8 = arith.extui %7 : vector<16x128xi1> to vector<16x128xi32>
    %9 = arith.sitofp %8 : vector<16x128xi32> to vector<16x128xf32>
    %cst = arith.constant dense<0.000000e+00> : vector<16x128xf32>
    %10 = tpu.matmul %9, %0, %cst {dimension_numbers = #tpu.dot_dimension_numbers<[1], [0], [0], [1], [0, 0, 1, 1], [], []>} : vector<16x128xf32>, vector<128x128xf32>, vector<16x128xf32> -> vector<16x128xf32>
    %11 = vector.extract_strided_slice %10 {offsets = [0, 0], sizes = [1, 128], strides = [1, 1]} : vector<16x128xf32> to vector<1x128xf32>
    %12 = vector.extract_strided_slice %10 {offsets = [8, 0], sizes = [1, 128], strides = [1, 1]} : vector<16x128xf32> to vector<1x128xf32>
    %13 = tpu.concatenate %11, %12 in 0 : vector<1x128xf32>, vector<1x128xf32> -> vector<2x128xf32>
    %14 = vector.extract_strided_slice %10 {offsets = [1, 0], sizes = [1, 128], strides = [1, 1]} : vector<16x128xf32> to vector<1x128xf32>
    %15 = vector.extract_strided_slice %10 {offsets = [9, 0], sizes = [1, 128], strides = [1, 1]} : vector<16x128xf32> to vector<1x128xf32>
    %16 = tpu.concatenate %14, %15 in 0 : vector<1x128xf32>, vector<1x128xf32> -> vector<2x128xf32>
    %17 = vector.extract_strided_slice %10 {offsets = [2, 0], sizes = [1, 128], strides = [1, 1]} : vector<16x128xf32> to vector<1x128xf32>
    %18 = vector.extract_strided_slice %10 {offsets = [10, 0], sizes = [1, 128], strides = [1, 1]} : vector<16x128xf32> to vector<1x128xf32>
    %19 = tpu.concatenate %17, %18 in 0 : vector<1x128xf32>, vector<1x128xf32> -> vector<2x128xf32>
    %20 = vector.extract_strided_slice %10 {offsets = [3, 0], sizes = [1, 128], strides = [1, 1]} : vector<16x128xf32> to vector<1x128xf32>
    %21 = vector.extract_strided_slice %10 {offsets = [11, 0], sizes = [1, 128], strides = [1, 1]} : vector<16x128xf32> to vector<1x128xf32>
    %22 = tpu.concatenate %20, %21 in 0 : vector<1x128xf32>, vector<1x128xf32> -> vector<2x128xf32>
    %23 = vector.extract_strided_slice %10 {offsets = [4, 0], sizes = [1, 128], strides = [1, 1]} : vector<16x128xf32> to vector<1x128xf32>
    %24 = vector.extract_strided_slice %10 {offsets = [12, 0], sizes = [1, 128], strides = [1, 1]} : vector<16x128xf32> to vector<1x128xf32>
    %25 = tpu.concatenate %23, %24 in 0 : vector<1x128xf32>, vector<1x128xf32> -> vector<2x128xf32>
    %26 = vector.extract_strided_slice %10 {offsets = [5, 0], sizes = [1, 128], strides = [1, 1]} : vector<16x128xf32> to vector<1x128xf32>
    %27 = vector.extract_strided_slice %10 {offsets = [13, 0], sizes = [1, 128], strides = [1, 1]} : vector<16x128xf32> to vector<1x128xf32>
    %28 = tpu.concatenate %26, %27 in 0 : vector<1x128xf32>, vector<1x128xf32> -> vector<2x128xf32>
    %29 = vector.extract_strided_slice %10 {offsets = [6, 0], sizes = [1, 128], strides = [1, 1]} : vector<16x128xf32> to vector<1x128xf32>
    %30 = vector.extract_strided_slice %10 {offsets = [14, 0], sizes = [1, 128], strides = [1, 1]} : vector<16x128xf32> to vector<1x128xf32>
    %31 = tpu.concatenate %29, %30 in 0 : vector<1x128xf32>, vector<1x128xf32> -> vector<2x128xf32>
    %32 = vector.extract_strided_slice %10 {offsets = [7, 0], sizes = [1, 128], strides = [1, 1]} : vector<16x128xf32> to vector<1x128xf32>
    %33 = vector.extract_strided_slice %10 {offsets = [15, 0], sizes = [1, 128], strides = [1, 1]} : vector<16x128xf32> to vector<1x128xf32>
    %34 = tpu.concatenate %32, %33 in 0 : vector<1x128xf32>, vector<1x128xf32> -> vector<2x128xf32>
    %35 = arith.truncf %1 : vector<128x128xf32> to vector<128x128xbf16>
    %c0_6 = arith.constant 0 : index
    %c0_7 = arith.constant 0 : index
    %36 = vector.load %arg1[%c0_6, %c0_7] : memref<2x128xf32, #tpu.memory_space<vmem>>, vector<2x128xf32>
    %37 = arith.truncf %36 : vector<2x128xf32> to vector<2x128xbf16>
    %cst_8 = arith.constant dense<0.000000e+00> : vector<2x128xf32>
    %38 = tpu.matmul %37, %35, %cst_8 {dimension_numbers = #tpu.dot_dimension_numbers<[1], [0], [0], [1], [0, 0, 1, 1], [], []>} : vector<2x128xbf16>, vector<128x128xbf16>, vector<2x128xf32> -> vector<2x128xf32>
    %39 = arith.addf %13, %38 : vector<2x128xf32>
    %40 = math.tanh %39 : vector<2x128xf32>
    %41 = arith.truncf %40 : vector<2x128xf32> to vector<2x128xbf16>
    %cst_9 = arith.constant dense<0.000000e+00> : vector<2x128xf32>
    %42 = tpu.matmul %41, %35, %cst_9 {dimension_numbers = #tpu.dot_dimension_numbers<[1], [0], [0], [1], [0, 0, 1, 1], [], []>} : vector<2x128xbf16>, vector<128x128xbf16>, vector<2x128xf32> -> vector<2x128xf32>
    %43 = arith.addf %16, %42 : vector<2x128xf32>
    %44 = math.tanh %43 : vector<2x128xf32>
    %45 = arith.truncf %44 : vector<2x128xf32> to vector<2x128xbf16>
    %cst_10 = arith.constant dense<0.000000e+00> : vector<2x128xf32>
    %46 = tpu.matmul %45, %35, %cst_10 {dimension_numbers = #tpu.dot_dimension_numbers<[1], [0], [0], [1], [0, 0, 1, 1], [], []>} : vector<2x128xbf16>, vector<128x128xbf16>, vector<2x128xf32> -> vector<2x128xf32>
    %47 = arith.addf %19, %46 : vector<2x128xf32>
    %48 = math.tanh %47 : vector<2x128xf32>
    %49 = arith.truncf %48 : vector<2x128xf32> to vector<2x128xbf16>
    %cst_11 = arith.constant dense<0.000000e+00> : vector<2x128xf32>
    %50 = tpu.matmul %49, %35, %cst_11 {dimension_numbers = #tpu.dot_dimension_numbers<[1], [0], [0], [1], [0, 0, 1, 1], [], []>} : vector<2x128xbf16>, vector<128x128xbf16>, vector<2x128xf32> -> vector<2x128xf32>
    %51 = arith.addf %22, %50 : vector<2x128xf32>
    %52 = math.tanh %51 : vector<2x128xf32>
    %53 = arith.truncf %52 : vector<2x128xf32> to vector<2x128xbf16>
    %cst_12 = arith.constant dense<0.000000e+00> : vector<2x128xf32>
    %54 = tpu.matmul %53, %35, %cst_12 {dimension_numbers = #tpu.dot_dimension_numbers<[1], [0], [0], [1], [0, 0, 1, 1], [], []>} : vector<2x128xbf16>, vector<128x128xbf16>, vector<2x128xf32> -> vector<2x128xf32>
    %55 = arith.addf %25, %54 : vector<2x128xf32>
    %56 = math.tanh %55 : vector<2x128xf32>
    %57 = arith.truncf %56 : vector<2x128xf32> to vector<2x128xbf16>
    %cst_13 = arith.constant dense<0.000000e+00> : vector<2x128xf32>
    %58 = tpu.matmul %57, %35, %cst_13 {dimension_numbers = #tpu.dot_dimension_numbers<[1], [0], [0], [1], [0, 0, 1, 1], [], []>} : vector<2x128xbf16>, vector<128x128xbf16>, vector<2x128xf32> -> vector<2x128xf32>
    %59 = arith.addf %28, %58 : vector<2x128xf32>
    %60 = math.tanh %59 : vector<2x128xf32>
    %61 = arith.truncf %60 : vector<2x128xf32> to vector<2x128xbf16>
    %cst_14 = arith.constant dense<0.000000e+00> : vector<2x128xf32>
    %62 = tpu.matmul %61, %35, %cst_14 {dimension_numbers = #tpu.dot_dimension_numbers<[1], [0], [0], [1], [0, 0, 1, 1], [], []>} : vector<2x128xbf16>, vector<128x128xbf16>, vector<2x128xf32> -> vector<2x128xf32>
    %63 = arith.addf %31, %62 : vector<2x128xf32>
    %64 = math.tanh %63 : vector<2x128xf32>
    %65 = arith.truncf %64 : vector<2x128xf32> to vector<2x128xbf16>
    %cst_15 = arith.constant dense<0.000000e+00> : vector<2x128xf32>
    %66 = tpu.matmul %65, %35, %cst_15 {dimension_numbers = #tpu.dot_dimension_numbers<[1], [0], [0], [1], [0, 0, 1, 1], [], []>} : vector<2x128xbf16>, vector<128x128xbf16>, vector<2x128xf32> -> vector<2x128xf32>
    %67 = arith.addf %34, %66 : vector<2x128xf32>
    %68 = math.tanh %67 : vector<2x128xf32>
    %69 = vector.extract_strided_slice %40 {offsets = [0, 0], sizes = [1, 128], strides = [1, 1]} : vector<2x128xf32> to vector<1x128xf32>
    %70 = vector.extract_strided_slice %44 {offsets = [0, 0], sizes = [1, 128], strides = [1, 1]} : vector<2x128xf32> to vector<1x128xf32>
    %71 = vector.extract_strided_slice %48 {offsets = [0, 0], sizes = [1, 128], strides = [1, 1]} : vector<2x128xf32> to vector<1x128xf32>
    %72 = vector.extract_strided_slice %52 {offsets = [0, 0], sizes = [1, 128], strides = [1, 1]} : vector<2x128xf32> to vector<1x128xf32>
    %73 = vector.extract_strided_slice %56 {offsets = [0, 0], sizes = [1, 128], strides = [1, 1]} : vector<2x128xf32> to vector<1x128xf32>
    %74 = vector.extract_strided_slice %60 {offsets = [0, 0], sizes = [1, 128], strides = [1, 1]} : vector<2x128xf32> to vector<1x128xf32>
    %75 = vector.extract_strided_slice %64 {offsets = [0, 0], sizes = [1, 128], strides = [1, 1]} : vector<2x128xf32> to vector<1x128xf32>
    %76 = vector.extract_strided_slice %68 {offsets = [0, 0], sizes = [1, 128], strides = [1, 1]} : vector<2x128xf32> to vector<1x128xf32>
    %77 = vector.extract_strided_slice %40 {offsets = [1, 0], sizes = [1, 128], strides = [1, 1]} : vector<2x128xf32> to vector<1x128xf32>
    %78 = vector.extract_strided_slice %44 {offsets = [1, 0], sizes = [1, 128], strides = [1, 1]} : vector<2x128xf32> to vector<1x128xf32>
    %79 = vector.extract_strided_slice %48 {offsets = [1, 0], sizes = [1, 128], strides = [1, 1]} : vector<2x128xf32> to vector<1x128xf32>
    %80 = vector.extract_strided_slice %52 {offsets = [1, 0], sizes = [1, 128], strides = [1, 1]} : vector<2x128xf32> to vector<1x128xf32>
    %81 = vector.extract_strided_slice %56 {offsets = [1, 0], sizes = [1, 128], strides = [1, 1]} : vector<2x128xf32> to vector<1x128xf32>
    %82 = vector.extract_strided_slice %60 {offsets = [1, 0], sizes = [1, 128], strides = [1, 1]} : vector<2x128xf32> to vector<1x128xf32>
    %83 = vector.extract_strided_slice %64 {offsets = [1, 0], sizes = [1, 128], strides = [1, 1]} : vector<2x128xf32> to vector<1x128xf32>
    %84 = vector.extract_strided_slice %68 {offsets = [1, 0], sizes = [1, 128], strides = [1, 1]} : vector<2x128xf32> to vector<1x128xf32>
    %85 = tpu.concatenate %69, %70, %71, %72, %73, %74, %75, %76, %77, %78, %79, %80, %81, %82, %83, %84 in 0 : vector<1x128xf32>, vector<1x128xf32>, vector<1x128xf32>, vector<1x128xf32>, vector<1x128xf32>, vector<1x128xf32>, vector<1x128xf32>, vector<1x128xf32>, vector<1x128xf32>, vector<1x128xf32>, vector<1x128xf32>, vector<1x128xf32>, vector<1x128xf32>, vector<1x128xf32>, vector<1x128xf32>, vector<1x128xf32> -> vector<16x128xf32>
    %cst_16 = arith.constant dense<0.000000e+00> : vector<16x128xf32>
    %86 = tpu.matmul %85, %2, %cst_16 {dimension_numbers = #tpu.dot_dimension_numbers<[1], [0], [0], [1], [0, 0, 1, 1], [], []>} : vector<16x128xf32>, vector<128x128xf32>, vector<16x128xf32> -> vector<16x128xf32>
    %87 = vector.broadcast %3 : vector<1x128xf32> to vector<16x128xf32>
    %88 = arith.addf %86, %87 : vector<16x128xf32>
    %89 = tpu.concatenate %88, %68 in 0 : vector<16x128xf32>, vector<2x128xf32> -> vector<18x128xf32>
    %c0_17 = arith.constant 0 : index
    %c0_18 = arith.constant 0 : index
    %90 = vector.load %arg3[%c0_17, %c0_18] : memref<18x128xf32, #tpu.memory_space<vmem>>, vector<18x128xf32>
    tpu.vector_store %arg3[%c0_17, %c0_18], %89 {strides = array<i32>} : memref<18x128xf32, #tpu.memory_space<vmem>>, vector<18x128xf32>,
    return
  }
}

</mosaic_0001>

<llo_original>
// kernel: char_rnn_forward.1
$region0: #{char_rnn_forward.1}
  #allocation0 [shape = 'u32[]', space=smem, size = 0x4, offset = 0x4, fixed_abs, tag = 'smem constant byte address 0x4 - core index']
  #allocation1 [shape = 'u32[144,128]{1,0:T(1,128)}', space=vmem, size = 0x12000, scoped, tag = 'internal scratch']
  %s0 = inlined_call_operand.vmem [shape: s32[16,1], index: 0, kind: input, shape index: {}]
  %s1 = inlined_call_operand.vmem [shape: f32[2,128], index: 1, kind: input, shape index: {}]
  %s2 = inlined_call_operand.hbm [shape: f32[392,128], index: 2, kind: input, shape index: {}]
  %s3 = inlined_call_operand.vmem [shape: f32[18,128], index: 3, kind: output, shape index: {}]
  %s4 = sld [smem:[#allocation0]]
  $region26: #{char_rnn_forward.1} parent=0
    _
  %s6 = ssub.s32 1, %s4
  %s7 = scalar_select 0, %s6, %s4
  $region1: #{char_rnn_forward.1} parent=0
    #allocation2 [shape = 'u8[200704]{0}', space=vmem, size = 0x31000, scoped, tag = 'input window, operand 2, single buffered']
    #allocation3 [shape = 's32[1]{0}', space=sflag, size = 0x4, scoped, tag = 'scoped memory for char_rnn_forward.1']
    %8 = vsyncpa [#allocation3], 0
    // Predicated region
    $region2: #{char_rnn_forward.1} parent=1 // pred_check
      _
    $region3: #{char_rnn_forward.1} parent=1 // pred_check_branch
      %10 = sbr.rel (0) target = $region5
    $region4: #{char_rnn_forward.1} parent=1 // pred_region
      _
    $region5: #{char_rnn_forward.1} parent=1 // pred_fallthru
      _
    // Predicated region
    $region6: #{char_rnn_forward.1} parent=1 // pred_check
      _
    $region7: #{char_rnn_forward.1} parent=1 // pred_check_branch
      %12 = sbr.rel (0) target = $region9
    $region8: #{char_rnn_forward.1} parent=1 // pred_region
      _
    $region9: #{char_rnn_forward.1} parent=1 // pred_fallthru
      _
    // Predicated region
    $region10: #{char_rnn_forward.1} parent=1 // pred_check
      _
    $region11: #{char_rnn_forward.1} parent=1 // pred_check_branch
      %14 = sbr.rel (0) target = $region13
    $region12: #{char_rnn_forward.1} parent=1 // pred_region
      %s16 = ssub.s32 6272, 6272
      %17 = vsyncadd [#allocation3], %s16
      %s18 = sshll.u32 [#allocation2], 4
      %s19 = int_to_ptr.vmem [resolvable:$true] %s18
      %24 = dma.hbm_to_vmem [thread:$0]  %s2, 6272, %s19, [#allocation3], 128, 128, 8
    $region13: #{char_rnn_forward.1} parent=1 // pred_fallthru
      _
    // Predicated region
    $region14: #{char_rnn_forward.1} parent=1 // pred_check
      _
    $region15: #{char_rnn_forward.1} parent=1 // pred_check_branch
      %26 = sbr.rel (0) target = $region17
    $region16: #{char_rnn_forward.1} parent=1 // pred_region
      %27 = dma.done [#allocation3], 6272
    $region17: #{char_rnn_forward.1} parent=1 // pred_fallthru
      _
    %v29 = vld [vmem:[#allocation2] sm:$0xff]
    %v30 = vld [vmem:[#allocation2 + $0x8] sm:$0xff]
    %v31 = vld [vmem:[#allocation2 + $0x10] sm:$0xff]
    %v32 = vld [vmem:[#allocation2 + $0x18] sm:$0xff]
    %v33 = vld [vmem:[#allocation2 + $0x20] sm:$0xff]
    %v34 = vld [vmem:[#allocation2 + $0x28] sm:$0xff]
    %v35 = vld [vmem:[#allocation2 + $0x30] sm:$0xff]
    %v36 = vld [vmem:[#allocation2 + $0x38] sm:$0xff]
    %v37 = vld [vmem:[#allocation2 + $0x40] sm:$0xff]
    %v38 = vld [vmem:[#allocation2 + $0x48] sm:$0xff]
    %v39 = vld [vmem:[#allocation2 + $0x50] sm:$0xff]
    %v40 = vld [vmem:[#allocation2 + $0x58] sm:$0xff]
    %v41 = vld [vmem:[#allocation2 + $0x60] sm:$0xff]
    %v42 = vld [vmem:[#allocation2 + $0x68] sm:$0xff]
    %v43 = vld [vmem:[#allocation2 + $0x70] sm:$0xff]
    %v44 = vld [vmem:[#allocation2 + $0x78] sm:$0xff]
    %v45 = vld [vmem:[#allocation2 + $0x80] sm:$0xff]
    %v46 = vld [vmem:[#allocation2 + $0x88] sm:$0xff]
    %v47 = vld [vmem:[#allocation2 + $0x90] sm:$0xff]
    %v48 = vld [vmem:[#allocation2 + $0x98] sm:$0xff]
    %v49 = vld [vmem:[#allocation2 + $0xa0] sm:$0xff]
    %v50 = vld [vmem:[#allocation2 + $0xa8] sm:$0xff]
    %v51 = vld [vmem:[#allocation2 + $0xb0] sm:$0xff]
    %v52 = vld [vmem:[#allocation2 + $0xb8] sm:$0xff]
    %v53 = vld [vmem:[#allocation2 + $0xc0] sm:$0xff]
    %v54 = vld [vmem:[#allocation2 + $0xc8] sm:$0xff]
    %v55 = vld [vmem:[#allocation2 + $0xd0] sm:$0xff]
    %v56 = vld [vmem:[#allocation2 + $0xd8] sm:$0xff]
    %v57 = vld [vmem:[#allocation2 + $0xe0] sm:$0xff]
    %v58 = vld [vmem:[#allocation2 + $0xe8] sm:$0xff]
    %v59 = vld [vmem:[#allocation2 + $0xf0] sm:$0xff]
    %v60 = vld [vmem:[#allocation2 + $0xf8] sm:$0xff]
    %v61 = vld [vmem:[#allocation2 + $0x100] sm:$0xff]
    %v62 = vld [vmem:[#allocation2 + $0x108] sm:$0xff]
    %v63 = vld [vmem:[#allocation2 + $0x110] sm:$0xff]
    %v64 = vld [vmem:[#allocation2 + $0x118] sm:$0xff]
    %v65 = vld [vmem:[#allocation2 + $0x120] sm:$0xff]
    %v66 = vld [vmem:[#allocation2 + $0x128] sm:$0xff]
    %v67 = vld [vmem:[#allocation2 + $0x130] sm:$0xff]
    %v68 = vld [vmem:[#allocation2 + $0x138] sm:$0xff]
    %v69 = vld [vmem:[#allocation2 + $0x140] sm:$0xff]
    %v70 = vld [vmem:[#allocation2 + $0x148] sm:$0xff]
    %v71 = vld [vmem:[#allocation2 + $0x150] sm:$0xff]
    %v72 = vld [vmem:[#allocation2 + $0x158] sm:$0xff]
    %v73 = vld [vmem:[#allocation2 + $0x160] sm:$0xff]
    %v74 = vld [vmem:[#allocation2 + $0x168] sm:$0xff]
    %v75 = vld [vmem:[#allocation2 + $0x170] sm:$0xff]
    %v76 = vld [vmem:[#allocation2 + $0x178] sm:$0xff]
    %v77 = vld [vmem:[#allocation2 + $0x180] sm:$0x1]
    %v78 = vld [vmem:[%s0] sm:$0xff]
    %v79 = vld [vmem:[%s0 + $0x8] sm:$0xff]
    %v80 = vlaneseq
    %v81 = vand.u32 %v80, 127
    %82 = vset.pattern.permute.xlu0 0
    %83 = vperm.xlu0 %82, %v78
    %v84 = vpop.permute.xlu0 %83
    %85 = vset.pattern.permute.xlu0 0
    %86 = vperm.xlu0 %85, %v79
    %v87 = vpop.permute.xlu0 %86
    %vm88 = vcmp.eq.s32.totalorder %v81, %v84
    %vm89 = vcmp.eq.s32.totalorder %v81, %v87
    %v90 = vsel %vm88, 1, 0
    %v91 = vsel %vm89, 1, 0
    %v92 = vcvt.s32.f32 %v90
    %v93 = vcvt.s32.f32 %v91
    %94 = vmatprep.subr.mxu0 0.0
    %95 = vmatpush1.msra.mxu0 %v44
    %96 = vmatprep.subr.mxu0 0.0
    %97 = vmatpush1.msra.mxu0 %v43
    %98 = vmatprep.subr.mxu0 0.0
    %99 = vmatpush1.msra.mxu0 %v42
    %100 = vmatprep.subr.mxu0 0.0
    %101 = vmatpush1.msra.mxu0 %v41
    %102 = vmatprep.subr.mxu0 0.0
    %103 = vmatpush1.msra.mxu0 %v40
    %104 = vmatprep.subr.mxu0 0.0
    %105 = vmatpush1.msra.mxu0 %v39
    %106 = vmatprep.subr.mxu0 0.0
    %107 = vmatpush1.msra.mxu0 %v38
    %108 = vmatprep.subr.mxu0 0.0
    %109 = vmatpush1.msra.mxu0 %v37
    %110 = vmatprep.subr.mxu0 0.0
    %111 = vmatpush1.msra.mxu0 %v36
    %112 = vmatprep.subr.mxu0 0.0
    %113 = vmatpush1.msra.mxu0 %v35
    %114 = vmatprep.subr.mxu0 0.0
    %115 = vmatpush1.msra.mxu0 %v34
    %116 = vmatprep.subr.mxu0 0.0
    %117 = vmatpush1.msra.mxu0 %v33
    %118 = vmatprep.subr.mxu0 0.0
    %119 = vmatpush1.msra.mxu0 %v32
    %120 = vmatprep.subr.mxu0 0.0
    %121 = vmatpush1.msra.mxu0 %v31
    %122 = vmatprep.subr.mxu0 0.0
    %123 = vmatpush1.msra.mxu0 %v30
    %124 = vmatprep.subr.mxu0 0.0
    %125 = vmatpush1.msra.mxu0 %v29
    %126 = vmatprep.subr.mxu0 0.0
    %127 = vmatpush2.msra.mxu0 0.0
    %128 = vmatprep.subr.mxu0 0.0
    %129 = vmatpush2.msra.mxu0 0.0
    %130 = vmatprep.subr.mxu0 0.0
    %131 = vmatpush2.msra.mxu0 0.0
    %132 = vmatprep.subr.mxu0 0.0
    %133 = vmatpush2.msra.mxu0 0.0
    %134 = vmatprep.subr.mxu0 0.0
    %135 = vmatpush2.msra.mxu0 0.0
    %136 = vmatprep.subr.mxu0 0.0
    %137 = vmatpush2.msra.mxu0 0.0
    %138 = vmatprep.subr.mxu0 0.0
    %139 = vmatpush2.msra.mxu0 0.0
    %140 = vmatprep.subr.mxu0 0.0
    %141 = vmatpush2.msra.mxu0 0.0
    %142 = vmatprep.subr.mxu0 0.0
    %143 = vmatpush2.msra.mxu0 0.0
    %144 = vmatprep.subr.mxu0 0.0
    %145 = vmatpush2.msra.mxu0 0.0
    %146 = vmatprep.subr.mxu0 0.0
    %147 = vmatpush2.msra.mxu0 0.0
    %148 = vmatprep.subr.mxu0 0.0
    %149 = vmatpush2.msra.mxu0 0.0
    %150 = vmatprep.subr.mxu0 0.0
    %151 = vmatpush2.msra.mxu0 0.0
    %152 = vmatprep.subr.mxu0 0.0
    %153 = vmatpush2.msra.mxu0 0.0
    %154 = vmatprep.subr.mxu0 0.0
    %155 = vmatpush2.msra.mxu0 0.0
    %156 = vmatprep.subr.mxu0 0.0
    %157 = vmatpush2.msra.mxu0 0.0
    %158 = vmatprep.mubr.f32.mxu0 0.0
    %159 = vmatmul.mubr.f32.gmra.mxu0 %v92
    %v160 = vpop.f32.mrf.mxu0
    %v161 = vadd.f32 0.0, %v160
    %v162 = vpop.f32.mrf.mxu0
    %163 = vmatprep.mubr.f32.mxu0 0.0
    %164 = vmatmul.mubr.f32.gmra.mxu0 %v93
    %v165 = vpop.f32.mrf.mxu0
    %v166 = vadd.f32 0.0, %v165
    %v167 = vpop.f32.mrf.mxu0
    %168 = vdwg.mxu0
    %v170 = vrot.slane %v166, 7
    %vm172 = vcmask 1040384
    %v173 = vsel %vm172, %v161, %v170
    %v175 = vrot.slane %v161, 1
    %v177 = vsel %vm172, %v175, %v166
    %v178 = vrot.slane %v161, 2
    %v180 = vrot.slane %v166, 1
    %v182 = vsel %vm172, %v178, %v180
    %v183 = vrot.slane %v161, 3
    %v185 = vrot.slane %v166, 2
    %v187 = vsel %vm172, %v183, %v185
    %v188 = vrot.slane %v161, 4
    %v190 = vrot.slane %v166, 3
    %v192 = vsel %vm172, %v188, %v190
    %v193 = vrot.slane %v161, 5
    %v195 = vrot.slane %v166, 4
    %v197 = vsel %vm172, %v193, %v195
    %v198 = vrot.slane %v161, 6
    %v200 = vrot.slane %v166, 5
    %v202 = vsel %vm172, %v198, %v200
    %v203 = vrot.slane %v161, 7
    %v205 = vrot.slane %v166, 6
    %v207 = vsel %vm172, %v203, %v205
    %v208 = vpack.c.bf16 %v46, %v45
    %v209 = vpack.c.bf16 %v48, %v47
    %v210 = vpack.c.bf16 %v50, %v49
    %v211 = vpack.c.bf16 %v52, %v51
    %v212 = vpack.c.bf16 %v54, %v53
    %v213 = vpack.c.bf16 %v56, %v55
    %v214 = vpack.c.bf16 %v58, %v57
    %v215 = vpack.c.bf16 %v60, %v59
    %v216 = vld [vmem:[%s1] sm:$0x3]
    %v217 = vpack.c.bf16 %v216, %v216
    %218 = vmatprep.subr.bf16.mxu0 0
    %219 = vmatpush1.bf16.msra.mxu0 %v215
    %220 = vmatprep.subr.bf16.mxu0 0
    %221 = vmatpush1.bf16.msra.mxu0 %v214
    %222 = vmatprep.subr.bf16.mxu0 0
    %223 = vmatpush1.bf16.msra.mxu0 %v213
    %224 = vmatprep.subr.bf16.mxu0 0
    %225 = vmatpush1.bf16.msra.mxu0 %v212
    %226 = vmatprep.subr.bf16.mxu0 0
    %227 = vmatpush1.bf16.msra.mxu0 %v211
    %228 = vmatprep.subr.bf16.mxu0 0
    %229 = vmatpush1.bf16.msra.mxu0 %v210
    %230 = vmatprep.subr.bf16.mxu0 0
    %231 = vmatpush1.bf16.msra.mxu0 %v209
    %232 = vmatprep.subr.bf16.mxu0 0
    %233 = vmatpush1.bf16.msra.mxu0 %v208
    %234 = vmatprep.subr.bf16.mxu0 0
    %235 = vmatpush2.bf16.msra.mxu0 0
    %236 = vmatprep.subr.bf16.mxu0 0
    %237 = vmatpush2.bf16.msra.mxu0 0
    %238 = vmatprep.subr.bf16.mxu0 0
    %239 = vmatpush2.bf16.msra.mxu0 0
    %240 = vmatprep.subr.bf16.mxu0 0
    %241 = vmatpush2.bf16.msra.mxu0 0
    %242 = vmatprep.subr.bf16.mxu0 0
    %243 = vmatpush2.bf16.msra.mxu0 0
    %244 = vmatprep.subr.bf16.mxu0 0
    %245 = vmatpush2.bf16.msra.mxu0 0
    %246 = vmatprep.subr.bf16.mxu0 0
    %247 = vmatpush2.bf16.msra.mxu0 0
    %248 = vmatprep.subr.bf16.mxu0 0
    %249 = vmatpush2.bf16.msra.mxu0 0
    %250 = vmatprep.mubr.bf16.mxu0 0
    %251 = vmatmul.mubr.bf16.gmra.mxu0 %v217
    %v252 = vpop.f32.mrf.mxu0
    %v253 = vadd.f32 0.0, %v252
    %v254 = vpop.f32.mrf.mxu0
    %v255 = vpop.f32.mrf.mxu0
    %v256 = vpop.f32.mrf.mxu0
    %257 = vdwg.mxu0
    %v258 = vadd.f32 %v173, %v253
    %v259 = vtanh.pop %v258
    %v260 = vpack.c.bf16 %v259, %v259
    %261 = vmatprep.subr.bf16.mxu0 0
    %262 = vmatpush1.bf16.msra.mxu0 %v215
    %263 = vmatprep.subr.bf16.mxu0 0
    %264 = vmatpush1.bf16.msra.mxu0 %v214
    %265 = vmatprep.subr.bf16.mxu0 0
    %266 = vmatpush1.bf16.msra.mxu0 %v213
    %267 = vmatprep.subr.bf16.mxu0 0
    %268 = vmatpush1.bf16.msra.mxu0 %v212
    %269 = vmatprep.subr.bf16.mxu0 0
    %270 = vmatpush1.bf16.msra.mxu0 %v211
    %271 = vmatprep.subr.bf16.mxu0 0
    %272 = vmatpush1.bf16.msra.mxu0 %v210
    %273 = vmatprep.subr.bf16.mxu0 0
    %274 = vmatpush1.bf16.msra.mxu0 %v209
    %275 = vmatprep.subr.bf16.mxu0 0
    %276 = vmatpush1.bf16.msra.mxu0 %v208
    %277 = vmatprep.subr.bf16.mxu0 0
    %278 = vmatpush2.bf16.msra.mxu0 0
    %279 = vmatprep.subr.bf16.mxu0 0
    %280 = vmatpush2.bf16.msra.mxu0 0
    %281 = vmatprep.subr.bf16.mxu0 0
    %282 = vmatpush2.bf16.msra.mxu0 0
    %283 = vmatprep.subr.bf16.mxu0 0
    %284 = vmatpush2.bf16.msra.mxu0 0
    %285 = vmatprep.subr.bf16.mxu0 0
    %286 = vmatpush2.bf16.msra.mxu0 0
    %287 = vmatprep.subr.bf16.mxu0 0
    %288 = vmatpush2.bf16.msra.mxu0 0
    %289 = vmatprep.subr.bf16.mxu0 0
    %290 = vmatpush2.bf16.msra.mxu0 0
    %291 = vmatprep.subr.bf16.mxu0 0
    %292 = vmatpush2.bf16.msra.mxu0 0
    %293 = vmatprep.mubr.bf16.mxu0 0
    %294 = vmatmul.mubr.bf16.gmra.mxu0 %v260
    %v295 = vpop.f32.mrf.mxu0
    %v296 = vadd.f32 0.0, %v295
    %v297 = vpop.f32.mrf.mxu0
    %v298 = vpop.f32.mrf.mxu0
    %v299 = vpop.f32.mrf.mxu0
    %300 = vdwg.mxu0
    %v301 = vadd.f32 %v177, %v296
    %v302 = vtanh.pop %v301
    %v303 = vpack.c.bf16 %v302, %v302
    %304 = vmatprep.subr.bf16.mxu0 0
    %305 = vmatpush1.bf16.msra.mxu0 %v215
    %306 = vmatprep.subr.bf16.mxu0 0
    %307 = vmatpush1.bf16.msra.mxu0 %v214
    %308 = vmatprep.subr.bf16.mxu0 0
    %309 = vmatpush1.bf16.msra.mxu0 %v213
    %310 = vmatprep.subr.bf16.mxu0 0
    %311 = vmatpush1.bf16.msra.mxu0 %v212
    %312 = vmatprep.subr.bf16.mxu0 0
    %313 = vmatpush1.bf16.msra.mxu0 %v211
    %314 = vmatprep.subr.bf16.mxu0 0
    %315 = vmatpush1.bf16.msra.mxu0 %v210
    %316 = vmatprep.subr.bf16.mxu0 0
    %317 = vmatpush1.bf16.msra.mxu0 %v209
    %318 = vmatprep.subr.bf16.mxu0 0
    %319 = vmatpush1.bf16.msra.mxu0 %v208
    %320 = vmatprep.subr.bf16.mxu0 0
    %321 = vmatpush2.bf16.msra.mxu0 0
    %322 = vmatprep.subr.bf16.mxu0 0
    %323 = vmatpush2.bf16.msra.mxu0 0
    %324 = vmatprep.subr.bf16.mxu0 0
    %325 = vmatpush2.bf16.msra.mxu0 0
    %326 = vmatprep.subr.bf16.mxu0 0
    %327 = vmatpush2.bf16.msra.mxu0 0
    %328 = vmatprep.subr.bf16.mxu0 0
    %329 = vmatpush2.bf16.msra.mxu0 0
    %330 = vmatprep.subr.bf16.mxu0 0
    %331 = vmatpush2.bf16.msra.mxu0 0
    %332 = vmatprep.subr.bf16.mxu0 0
    %333 = vmatpush2.bf16.msra.mxu0 0
    %334 = vmatprep.subr.bf16.mxu0 0
    %335 = vmatpush2.bf16.msra.mxu0 0
    %336 = vmatprep.mubr.bf16.mxu0 0
    %337 = vmatmul.mubr.bf16.gmra.mxu0 %v303
    %v338 = vpop.f32.mrf.mxu0
    %v339 = vadd.f32 0.0, %v338
    %v340 = vpop.f32.mrf.mxu0
    %v341 = vpop.f32.mrf.mxu0
    %v342 = vpop.f32.mrf.mxu0
    %343 = vdwg.mxu0
    %v344 = vadd.f32 %v182, %v339
    %v345 = vtanh.pop %v344
    %v346 = vpack.c.bf16 %v345, %v345
    %347 = vmatprep.subr.bf16.mxu0 0
    %348 = vmatpush1.bf16.msra.mxu0 %v215
    %349 = vmatprep.subr.bf16.mxu0 0
    %350 = vmatpush1.bf16.msra.mxu0 %v214
    %351 = vmatprep.subr.bf16.mxu0 0
    %352 = vmatpush1.bf16.msra.mxu0 %v213
    %353 = vmatprep.subr.bf16.mxu0 0
    %354 = vmatpush1.bf16.msra.mxu0 %v212
    %355 = vmatprep.subr.bf16.mxu0 0
    %356 = vmatpush1.bf16.msra.mxu0 %v211
    %357 = vmatprep.subr.bf16.mxu0 0
    %358 = vmatpush1.bf16.msra.mxu0 %v210
    %359 = vmatprep.subr.bf16.mxu0 0
    %360 = vmatpush1.bf16.msra.mxu0 %v209
    %361 = vmatprep.subr.bf16.mxu0 0
    %362 = vmatpush1.bf16.msra.mxu0 %v208
    %363 = vmatprep.subr.bf16.mxu0 0
    %364 = vmatpush2.bf16.msra.mxu0 0
    %365 = vmatprep.subr.bf16.mxu0 0
    %366 = vmatpush2.bf16.msra.mxu0 0
    %367 = vmatprep.subr.bf16.mxu0 0
    %368 = vmatpush2.bf16.msra.mxu0 0
    %369 = vmatprep.subr.bf16.mxu0 0
    %370 = vmatpush2.bf16.msra.mxu0 0
    %371 = vmatprep.subr.bf16.mxu0 0
    %372 = vmatpush2.bf16.msra.mxu0 0
    %373 = vmatprep.subr.bf16.mxu0 0
    %374 = vmatpush2.bf16.msra.mxu0 0
    %375 = vmatprep.subr.bf16.mxu0 0
    %376 = vmatpush2.bf16.msra.mxu0 0
    %377 = vmatprep.subr.bf16.mxu0 0
    %378 = vmatpush2.bf16.msra.mxu0 0
    %379 = vmatprep.mubr.bf16.mxu0 0
    %380 = vmatmul.mubr.bf16.gmra.mxu0 %v346
    %v381 = vpop.f32.mrf.mxu0
    %v382 = vadd.f32 0.0, %v381
    %v383 = vpop.f32.mrf.mxu0
    %v384 = vpop.f32.mrf.mxu0
    %v385 = vpop.f32.mrf.mxu0
    %386 = vdwg.mxu0
    %v387 = vadd.f32 %v187, %v382
    %v388 = vtanh.pop %v387
    %v389 = vpack.c.bf16 %v388, %v388
    %390 = vmatprep.subr.bf16.mxu0 0
    %391 = vmatpush1.bf16.msra.mxu0 %v215
    %392 = vmatprep.subr.bf16.mxu0 0
    %393 = vmatpush1.bf16.msra.mxu0 %v214
    %394 = vmatprep.subr.bf16.mxu0 0
    %395 = vmatpush1.bf16.msra.mxu0 %v213
    %396 = vmatprep.subr.bf16.mxu0 0
    %397 = vmatpush1.bf16.msra.mxu0 %v212
    %398 = vmatprep.subr.bf16.mxu0 0
    %399 = vmatpush1.bf16.msra.mxu0 %v211
    %400 = vmatprep.subr.bf16.mxu0 0
    %401 = vmatpush1.bf16.msra.mxu0 %v210
    %402 = vmatprep.subr.bf16.mxu0 0
    %403 = vmatpush1.bf16.msra.mxu0 %v209
    %404 = vmatprep.subr.bf16.mxu0 0
    %405 = vmatpush1.bf16.msra.mxu0 %v208
    %406 = vmatprep.subr.bf16.mxu0 0
    %407 = vmatpush2.bf16.msra.mxu0 0
    %408 = vmatprep.subr.bf16.mxu0 0
    %409 = vmatpush2.bf16.msra.mxu0 0
    %410 = vmatprep.subr.bf16.mxu0 0
    %411 = vmatpush2.bf16.msra.mxu0 0
    %412 = vmatprep.subr.bf16.mxu0 0
    %413 = vmatpush2.bf16.msra.mxu0 0
    %414 = vmatprep.subr.bf16.mxu0 0
    %415 = vmatpush2.bf16.msra.mxu0 0
    %416 = vmatprep.subr.bf16.mxu0 0
    %417 = vmatpush2.bf16.msra.mxu0 0
    %418 = vmatprep.subr.bf16.mxu0 0
    %419 = vmatpush2.bf16.msra.mxu0 0
    %420 = vmatprep.subr.bf16.mxu0 0
    %421 = vmatpush2.bf16.msra.mxu0 0
    %422 = vmatprep.mubr.bf16.mxu0 0
    %423 = vmatmul.mubr.bf16.gmra.mxu0 %v389
    %v424 = vpop.f32.mrf.mxu0
    %v425 = vadd.f32 0.0, %v424
    %v426 = vpop.f32.mrf.mxu0
    %v427 = vpop.f32.mrf.mxu0
    %v428 = vpop.f32.mrf.mxu0
    %429 = vdwg.mxu0
    %v430 = vadd.f32 %v192, %v425
    %v431 = vtanh.pop %v430
    %v432 = vpack.c.bf16 %v431, %v431
    %433 = vmatprep.subr.bf16.mxu0 0
    %434 = vmatpush1.bf16.msra.mxu0 %v215
    %435 = vmatprep.subr.bf16.mxu0 0
    %436 = vmatpush1.bf16.msra.mxu0 %v214
    %437 = vmatprep.subr.bf16.mxu0 0
    %438 = vmatpush1.bf16.msra.mxu0 %v213
    %439 = vmatprep.subr.bf16.mxu0 0
    %440 = vmatpush1.bf16.msra.mxu0 %v212
    %441 = vmatprep.subr.bf16.mxu0 0
    %442 = vmatpush1.bf16.msra.mxu0 %v211
    %443 = vmatprep.subr.bf16.mxu0 0
    %444 = vmatpush1.bf16.msra.mxu0 %v210
    %445 = vmatprep.subr.bf16.mxu0 0
    %446 = vmatpush1.bf16.msra.mxu0 %v209
    %447 = vmatprep.subr.bf16.mxu0 0
    %448 = vmatpush1.bf16.msra.mxu0 %v208
    %449 = vmatprep.subr.bf16.mxu0 0
    %450 = vmatpush2.bf16.msra.mxu0 0
    %451 = vmatprep.subr.bf16.mxu0 0
    %452 = vmatpush2.bf16.msra.mxu0 0
    %453 = vmatprep.subr.bf16.mxu0 0
    %454 = vmatpush2.bf16.msra.mxu0 0
    %455 = vmatprep.subr.bf16.mxu0 0
    %456 = vmatpush2.bf16.msra.mxu0 0
    %457 = vmatprep.subr.bf16.mxu0 0
    %458 = vmatpush2.bf16.msra.mxu0 0
    %459 = vmatprep.subr.bf16.mxu0 0
    %460 = vmatpush2.bf16.msra.mxu0 0
    %461 = vmatprep.subr.bf16.mxu0 0
    %462 = vmatpush2.bf16.msra.mxu0 0
    %463 = vmatprep.subr.bf16.mxu0 0
    %464 = vmatpush2.bf16.msra.mxu0 0
    %465 = vmatprep.mubr.bf16.mxu0 0
    %466 = vmatmul.mubr.bf16.gmra.mxu0 %v432
    %v467 = vpop.f32.mrf.mxu0
    %v468 = vadd.f32 0.0, %v467
    %v469 = vpop.f32.mrf.mxu0
    %v470 = vpop.f32.mrf.mxu0
    %v471 = vpop.f32.mrf.mxu0
    %472 = vdwg.mxu0
    %v473 = vadd.f32 %v197, %v468
    %v474 = vtanh.pop %v473
    %v475 = vpack.c.bf16 %v474, %v474
    %476 = vmatprep.subr.bf16.mxu0 0
    %477 = vmatpush1.bf16.msra.mxu0 %v215
    %478 = vmatprep.subr.bf16.mxu0 0
    %479 = vmatpush1.bf16.msra.mxu0 %v214
    %480 = vmatprep.subr.bf16.mxu0 0
    %481 = vmatpush1.bf16.msra.mxu0 %v213
    %482 = vmatprep.subr.bf16.mxu0 0
    %483 = vmatpush1.bf16.msra.mxu0 %v212
    %484 = vmatprep.subr.bf16.mxu0 0
    %485 = vmatpush1.bf16.msra.mxu0 %v211
    %486 = vmatprep.subr.bf16.mxu0 0
    %487 = vmatpush1.bf16.msra.mxu0 %v210
    %488 = vmatprep.subr.bf16.mxu0 0
    %489 = vmatpush1.bf16.msra.mxu0 %v209
    %490 = vmatprep.subr.bf16.mxu0 0
    %491 = vmatpush1.bf16.msra.mxu0 %v208
    %492 = vmatprep.subr.bf16.mxu0 0
    %493 = vmatpush2.bf16.msra.mxu0 0
    %494 = vmatprep.subr.bf16.mxu0 0
    %495 = vmatpush2.bf16.msra.mxu0 0
    %496 = vmatprep.subr.bf16.mxu0 0
    %497 = vmatpush2.bf16.msra.mxu0 0
    %498 = vmatprep.subr.bf16.mxu0 0
    %499 = vmatpush2.bf16.msra.mxu0 0
    %500 = vmatprep.subr.bf16.mxu0 0
    %501 = vmatpush2.bf16.msra.mxu0 0
    %502 = vmatprep.subr.bf16.mxu0 0
    %503 = vmatpush2.bf16.msra.mxu0 0
    %504 = vmatprep.subr.bf16.mxu0 0
    %505 = vmatpush2.bf16.msra.mxu0 0
    %506 = vmatprep.subr.bf16.mxu0 0
    %507 = vmatpush2.bf16.msra.mxu0 0
    %508 = vmatprep.mubr.bf16.mxu0 0
    %509 = vmatmul.mubr.bf16.gmra.mxu0 %v475
    %v510 = vpop.f32.mrf.mxu0
    %v511 = vadd.f32 0.0, %v510
    %v512 = vpop.f32.mrf.mxu0
    %v513 = vpop.f32.mrf.mxu0
    %v514 = vpop.f32.mrf.mxu0
    %515 = vdwg.mxu0
    %v516 = vadd.f32 %v202, %v511
    %v517 = vtanh.pop %v516
    %v518 = vpack.c.bf16 %v517, %v517
    %519 = vmatprep.subr.bf16.mxu0 0
    %520 = vmatpush1.bf16.msra.mxu0 %v215
    %521 = vmatprep.subr.bf16.mxu0 0
    %522 = vmatpush1.bf16.msra.mxu0 %v214
    %523 = vmatprep.subr.bf16.mxu0 0
    %524 = vmatpush1.bf16.msra.mxu0 %v213
    %525 = vmatprep.subr.bf16.mxu0 0
    %526 = vmatpush1.bf16.msra.mxu0 %v212
    %527 = vmatprep.subr.bf16.mxu0 0
    %528 = vmatpush1.bf16.msra.mxu0 %v211
    %529 = vmatprep.subr.bf16.mxu0 0
    %530 = vmatpush1.bf16.msra.mxu0 %v210
    %531 = vmatprep.subr.bf16.mxu0 0
    %532 = vmatpush1.bf16.msra.mxu0 %v209
    %533 = vmatprep.subr.bf16.mxu0 0
    %534 = vmatpush1.bf16.msra.mxu0 %v208
    %535 = vmatprep.subr.bf16.mxu0 0
    %536 = vmatpush2.bf16.msra.mxu0 0
    %537 = vmatprep.subr.bf16.mxu0 0
    %538 = vmatpush2.bf16.msra.mxu0 0
    %539 = vmatprep.subr.bf16.mxu0 0
    %540 = vmatpush2.bf16.msra.mxu0 0
    %541 = vmatprep.subr.bf16.mxu0 0
    %542 = vmatpush2.bf16.msra.mxu0 0
    %543 = vmatprep.subr.bf16.mxu0 0
    %544 = vmatpush2.bf16.msra.mxu0 0
    %545 = vmatprep.subr.bf16.mxu0 0
    %546 = vmatpush2.bf16.msra.mxu0 0
    %547 = vmatprep.subr.bf16.mxu0 0
    %548 = vmatpush2.bf16.msra.mxu0 0
    %549 = vmatprep.subr.bf16.mxu0 0
    %550 = vmatpush2.bf16.msra.mxu0 0
    %551 = vmatprep.mubr.bf16.mxu0 0
    %552 = vmatmul.mubr.bf16.gmra.mxu0 %v518
    %v553 = vpop.f32.mrf.mxu0
    %v554 = vadd.f32 0.0, %v553
    %v555 = vpop.f32.mrf.mxu0
    %v556 = vpop.f32.mrf.mxu0
    %v557 = vpop.f32.mrf.mxu0
    %558 = vdwg.mxu0
    %v559 = vadd.f32 %v207, %v554
    %v560 = vtanh.pop %v559
    %v562 = vrot.slane %v302, 7
    %v565 = vrot.slane %v345, 6
    %v568 = vrot.slane %v388, 5
    %v571 = vrot.slane %v431, 4
    %v574 = vrot.slane %v474, 3
    %v577 = vrot.slane %v517, 2
    %v580 = vrot.slane %v560, 1
    %v583 = vrot.slane %v259, 1
    %v585 = vrot.slane %v345, 7
    %v587 = vrot.slane %v388, 6
    %v589 = vrot.slane %v431, 5
    %v591 = vrot.slane %v474, 4
    %v593 = vrot.slane %v517, 3
    %v595 = vrot.slane %v560, 2
    %v597 = vsel %vm172, %v259, %v562
    %vm598 = vcmask 1041408
    %v599 = vsel %vm598, %v597, %v565
    %vm600 = vcmask 1042432
    %v601 = vsel %vm600, %v599, %v568
    %vm602 = vcmask 1043456
    %v603 = vsel %vm602, %v601, %v571
    %vm604 = vcmask 1044480
    %v605 = vsel %vm604, %v603, %v574
    %vm606 = vcmask 1045504
    %v607 = vsel %vm606, %v605, %v577
    %vm608 = vcmask 1046528
    %v609 = vsel %vm608, %v607, %v580
    %v610 = vsel %vm172, %v583, %v302
    %v611 = vsel %vm598, %v610, %v585
    %v612 = vsel %vm600, %v611, %v587
    %v613 = vsel %vm602, %v612, %v589
    %v614 = vsel %vm604, %v613, %v591
    %v615 = vsel %vm606, %v614, %v593
    %v616 = vsel %vm608, %v615, %v595
    %v617 = vlaneseq
    %v618 = vshrl.u32 %v617, 7
    %v619 = vsub.s32 0, %v618
    %v620 = vrot.slane %v77, %v619
    %621 = vmatprep.subr.mxu0 0.0
    %622 = vmatpush1.msra.mxu0 %v76
    %623 = vmatprep.subr.mxu0 0.0
    %624 = vmatpush1.msra.mxu0 %v75
    %625 = vmatprep.subr.mxu0 0.0
    %626 = vmatpush1.msra.mxu0 %v74
    %627 = vmatprep.subr.mxu0 0.0
    %628 = vmatpush1.msra.mxu0 %v73
    %629 = vmatprep.subr.mxu0 0.0
    %630 = vmatpush1.msra.mxu0 %v72
    %631 = vmatprep.subr.mxu0 0.0
    %632 = vmatpush1.msra.mxu0 %v71
    %633 = vmatprep.subr.mxu0 0.0
    %634 = vmatpush1.msra.mxu0 %v70
    %635 = vmatprep.subr.mxu0 0.0
    %636 = vmatpush1.msra.mxu0 %v69
    %637 = vmatprep.subr.mxu0 0.0
    %638 = vmatpush1.msra.mxu0 %v68
    %639 = vmatprep.subr.mxu0 0.0
    %640 = vmatpush1.msra.mxu0 %v67
    %641 = vmatprep.subr.mxu0 0.0
    %642 = vmatpush1.msra.mxu0 %v66
    %643 = vmatprep.subr.mxu0 0.0
    %644 = vmatpush1.msra.mxu0 %v65
    %645 = vmatprep.subr.mxu0 0.0
    %646 = vmatpush1.msra.mxu0 %v64
    %647 = vmatprep.subr.mxu0 0.0
    %648 = vmatpush1.msra.mxu0 %v63
    %649 = vmatprep.subr.mxu0 0.0
    %650 = vmatpush1.msra.mxu0 %v62
    %651 = vmatprep.subr.mxu0 0.0
    %652 = vmatpush1.msra.mxu0 %v61
    %653 = vmatprep.subr.mxu0 0.0
    %654 = vmatpush2.msra.mxu0 0.0
    %655 = vmatprep.subr.mxu0 0.0
    %656 = vmatpush2.msra.mxu0 0.0
    %657 = vmatprep.subr.mxu0 0.0
    %658 = vmatpush2.msra.mxu0 0.0
    %659 = vmatprep.subr.mxu0 0.0
    %660 = vmatpush2.msra.mxu0 0.0
    %661 = vmatprep.subr.mxu0 0.0
    %662 = vmatpush2.msra.mxu0 0.0
    %663 = vmatprep.subr.mxu0 0.0
    %664 = vmatpush2.msra.mxu0 0.0
    %665 = vmatprep.subr.mxu0 0.0
    %666 = vmatpush2.msra.mxu0 0.0
    %667 = vmatprep.subr.mxu0 0.0
    %668 = vmatpush2.msra.mxu0 0.0
    %669 = vmatprep.subr.mxu0 0.0
    %670 = vmatpush2.msra.mxu0 0.0
    %671 = vmatprep.subr.mxu0 0.0
    %672 = vmatpush2.msra.mxu0 0.0
    %673 = vmatprep.subr.mxu0 0.0
    %674 = vmatpush2.msra.mxu0 0.0
    %675 = vmatprep.subr.mxu0 0.0
    %676 = vmatpush2.msra.mxu0 0.0
    %677 = vmatprep.subr.mxu0 0.0
    %678 = vmatpush2.msra.mxu0 0.0
    %679 = vmatprep.subr.mxu0 0.0
    %680 = vmatpush2.msra.mxu0 0.0
    %681 = vmatprep.subr.mxu0 0.0
    %682 = vmatpush2.msra.mxu0 0.0
    %683 = vmatprep.subr.mxu0 0.0
    %684 = vmatpush2.msra.mxu0 0.0
    %685 = vmatprep.mubr.f32.mxu0 0.0
    %686 = vmatmul.mubr.f32.gmra.mxu0 %v609
    %v687 = vpop.f32.mrf.mxu0
    %v688 = vadd.f32 %v620, %v687
    %v689 = vpop.f32.mrf.mxu0
    %690 = vmatprep.mubr.f32.mxu0 0.0
    %691 = vmatmul.mubr.f32.gmra.mxu0 %v616
    %v692 = vpop.f32.mrf.mxu0
    %v693 = vadd.f32 %v620, %v692
    %v694 = vpop.f32.mrf.mxu0
    %695 = vdwg.mxu0
    %696 = vst [vmem:[%s3] sm:$0xff] %v688
    %697 = vst [vmem:[%s3 + $0x8] sm:$0xff] %v693
    %698 = vst [vmem:[%s3 + $0x10] sm:$0x3] %v560
    // Predicated region
    $region18: #{char_rnn_forward.1} parent=1 // pred_check
      _
    $region19: #{char_rnn_forward.1} parent=1 // pred_check_branch
      %700 = sbr.rel (0) target = $region21
    $region20: #{char_rnn_forward.1} parent=1 // pred_region
      _
    $region21: #{char_rnn_forward.1} parent=1 // pred_fallthru
      _
    // Predicated region
    $region22: #{char_rnn_forward.1} parent=1 // pred_check
      _
    $region23: #{char_rnn_forward.1} parent=1 // pred_check_branch
      %702 = sbr.rel (0) target = $region25
    $region24: #{char_rnn_forward.1} parent=1 // pred_region
      _
    $region25: #{char_rnn_forward.1} parent=1 // pred_fallthru
      _
    %703 = vsyncpa [#allocation3], 1

</llo_original>
